<compile_context>
chip_gen: v5e
topology: v5e:2x2
jax: 0.10.0
libtpu: 0.0.40
codegen_flags: <defaults>
</compile_context>

<pallas_src>
import functools

import jax
import jax.numpy as jnp
from jax.experimental import pallas as pl
from jax.experimental.pallas import tpu as pltpu


def _round_up(x, m):
    return ((x + m - 1) // m) * m


def _pick_tile(dim_padded, quantum, max_tile):
    """Largest multiple of `quantum` that divides `dim_padded` and is <= max_tile."""
    if dim_padded <= max_tile:
        return dim_padded
    t = max_tile - (max_tile % quantum)
    while t >= quantum:
        if dim_padded % t == 0:
            return t
        t -= quantum
    return quantum


def _row_tile(rows_padded, cols, max_elems=1 << 19, max_tile=1024):
    """Row tile for elementwise kernels, capped so tile*cols stays VMEM-friendly."""
    cap = max(8, min(max_tile, (max_elems // max(cols, 1)) // 8 * 8))
    return _pick_tile(rows_padded, 8, cap)


# ----------------------------- Pallas kernels ------------------------------

def _matmul_kernel(a_ref, b_ref, o_ref, acc_ref):
    k = pl.program_id(2)

    @pl.when(k == 0)
    def _():
        acc_ref[...] = jnp.zeros_like(acc_ref)

    acc_ref[...] += jnp.dot(a_ref[...], b_ref[...],
                            preferred_element_type=jnp.float32)

    @pl.when(k == pl.num_programs(2) - 1)
    def _():
        o_ref[...] = acc_ref[...].astype(o_ref.dtype)


def _matmul_bias_kernel(a_ref, b_ref, bias_ref, o_ref, acc_ref):
    k = pl.program_id(2)

    @pl.when(k == 0)
    def _():
        acc_ref[...] = jnp.zeros_like(acc_ref)

    acc_ref[...] += jnp.dot(a_ref[...], b_ref[...],
                            preferred_element_type=jnp.float32)

    @pl.when(k == pl.num_programs(2) - 1)
    def _():
        o_ref[...] = (acc_ref[...] + bias_ref[...]).astype(o_ref.dtype)


def matmul_bias(a, b, bias=None, out_dtype=jnp.bfloat16):
    """(M,K) @ (K,N) [+ bias] on the MXU. bf16 operands, fp32 accumulate.

    Grid = (M tiles, N tiles, K tiles); M/N parallel (megacore), K reduction.
    """
    M, K = a.shape
    K2, N = b.shape
    assert K == K2
    Mp = _round_up(M, 8)
    Kp = _round_up(K, 128)
    Np = _round_up(N, 128)
    tm = _pick_tile(Mp, 8, 512)
    tk = _pick_tile(Kp, 128, 1024)
    tn = _pick_tile(Np, 128, 512)

    a_p = jnp.pad(a.astype(jnp.bfloat16), ((0, Mp - M), (0, Kp - K)))
    b_p = jnp.pad(b.astype(jnp.bfloat16), ((0, Kp - K), (0, Np - N)))

    grid = (Mp // tm, Np // tn, Kp // tk)
    a_spec = pl.BlockSpec((tm, tk), lambda i, j, k: (i, k))
    b_spec = pl.BlockSpec((tk, tn), lambda i, j, k: (k, j))
    o_spec = pl.BlockSpec((tm, tn), lambda i, j, k: (i, j))
    scratch = [pltpu.VMEM((tm, tn), jnp.float32)]
    cparams = pltpu.CompilerParams(
        dimension_semantics=("parallel", "parallel", "arbitrary"))

    if bias is None:
        out = pl.pallas_call(
            _matmul_kernel,
            out_shape=jax.ShapeDtypeStruct((Mp, Np), out_dtype),
            grid_spec=pltpu.PrefetchScalarGridSpec(
                num_scalar_prefetch=0, grid=grid,
                in_specs=[a_spec, b_spec],
                out_specs=o_spec,
                scratch_shapes=scratch),
            compiler_params=cparams,
        )(a_p, b_p)
    else:
        bias_p = jnp.pad(bias.astype(jnp.float32).reshape(1, N),
                         ((0, 0), (0, Np - N)))
        bias_spec = pl.BlockSpec((1, tn), lambda i, j, k: (0, j))
        out = pl.pallas_call(
            _matmul_bias_kernel,
            out_shape=jax.ShapeDtypeStruct((Mp, Np), out_dtype),
            grid_spec=pltpu.PrefetchScalarGridSpec(
                num_scalar_prefetch=0, grid=grid,
                in_specs=[a_spec, b_spec, bias_spec],
                out_specs=o_spec,
                scratch_shapes=scratch),
            compiler_params=cparams,
        )(a_p, b_p, bias_p)
    return out[:M, :N]


def _bn_stats_kernel(x_ref, sum_ref, sq_ref):
    i = pl.program_id(0)

    @pl.when(i == 0)
    def _():
        sum_ref[...] = jnp.zeros_like(sum_ref)
        sq_ref[...] = jnp.zeros_like(sq_ref)

    x = x_ref[...].astype(jnp.float32)
    sum_ref[...] += jnp.sum(x, axis=0, keepdims=True)
    sq_ref[...] += jnp.sum(x * x, axis=0, keepdims=True)


def _affine_kernel(x_ref, scale_ref, shift_ref, o_ref, *, relu):
    y = x_ref[...].astype(jnp.float32) * scale_ref[...] + shift_ref[...]
    if relu:
        y = jnp.maximum(y, 0.0)
    o_ref[...] = y.astype(o_ref.dtype)


def _affine_add_relu_kernel(x_ref, r_ref, scale_ref, shift_ref, o_ref):
    y = x_ref[...].astype(jnp.float32) * scale_ref[...] + shift_ref[...]
    y = y + r_ref[...].astype(jnp.float32)
    o_ref[...] = jnp.maximum(y, 0.0).astype(o_ref.dtype)


def batchnorm_act(x2d, gamma, beta, relu=True, residual=None,
                  eps=1e-5, out_dtype=jnp.bfloat16):
    """Train-mode BatchNorm (batch stats over rows), optional ReLU and optional
    fused residual add+ReLU epilogue. Two-pass, row-tiled."""
    M, C = x2d.shape
    Mp = _round_up(M, 8)
    tm = _row_tile(Mp, C)
    if Mp != M:
        x2d = jnp.pad(x2d, ((0, Mp - M), (0, 0)))
        if residual is not None:
            residual = jnp.pad(residual, ((0, Mp - M), (0, 0)))

    grid = (Mp // tm,)
    row_spec = pl.BlockSpec((tm, C), lambda i: (i, 0))
    vec_spec = pl.BlockSpec((1, C), lambda i: (0, 0))

    # Pass 1: per-column sum / sum-of-squares reduced over row tiles.
    s, sq = pl.pallas_call(
        _bn_stats_kernel,
        out_shape=(jax.ShapeDtypeStruct((1, C), jnp.float32),
                   jax.ShapeDtypeStruct((1, C), jnp.float32)),
        grid_spec=pltpu.PrefetchScalarGridSpec(
            num_scalar_prefetch=0, grid=grid,
            in_specs=[row_spec],
            out_specs=[vec_spec, vec_spec]),
        compiler_params=pltpu.CompilerParams(
            dimension_semantics=("arbitrary",)),
    )(x2d)

    inv_n = 1.0 / float(M)
    mean = s * inv_n
    # TODO(synk): E[x^2]-mean^2 in fp32 can lose precision for very large-magnitude
    # activations; a subtract-mean second reduction would be more robust.
    var = jnp.maximum(sq * inv_n - mean * mean, 0.0)
    scale = gamma.reshape(1, C).astype(jnp.float32) * jax.lax.rsqrt(var + eps)
    shift = beta.reshape(1, C).astype(jnp.float32) - mean * scale

    # Pass 2: row-tiled affine (+ReLU) (+fused residual add).
    if residual is None:
        kern = functools.partial(_affine_kernel, relu=relu)
        operands = (x2d, scale, shift)
        in_specs = [row_spec, vec_spec, vec_spec]
    else:
        kern = _affine_add_relu_kernel
        operands = (x2d, residual, scale, shift)
        in_specs = [row_spec, row_spec, vec_spec, vec_spec]

    y = pl.pallas_call(
        kern,
        out_shape=jax.ShapeDtypeStruct((Mp, C), out_dtype),
        grid_spec=pltpu.PrefetchScalarGridSpec(
            num_scalar_prefetch=0, grid=grid,
            in_specs=in_specs,
            out_specs=row_spec),
        compiler_params=pltpu.CompilerParams(
            dimension_semantics=("parallel",)),
    )(*operands)
    return y[:M]


def _l2_normalize_kernel(x_ref, o_ref, *, eps):
    x = x_ref[...].astype(jnp.float32)
    inv = jax.lax.rsqrt(jnp.maximum(jnp.sum(x * x, axis=-1, keepdims=True),
                                    eps * eps))
    o_ref[...] = (x * inv).astype(o_ref.dtype)


def l2_normalize(x2d, eps=1e-12):
    """F.normalize(x, p=2, dim=-1) semantics, row-tiled, fp32 output."""
    M, C = x2d.shape
    Mp = _round_up(M, 8)
    tm = _row_tile(Mp, C)
    if Mp != M:
        x2d = jnp.pad(x2d, ((0, Mp - M), (0, 0)))
    row_spec = pl.BlockSpec((tm, C), lambda i: (i, 0))
    y = pl.pallas_call(
        functools.partial(_l2_normalize_kernel, eps=eps),
        out_shape=jax.ShapeDtypeStruct((Mp, C), jnp.float32),
        grid_spec=pltpu.PrefetchScalarGridSpec(
            num_scalar_prefetch=0, grid=(Mp // tm,),
            in_specs=[row_spec],
            out_specs=row_spec),
        compiler_params=pltpu.CompilerParams(
            dimension_semantics=("parallel",)),
    )(x2d)
    return y[:M]


# ------------------------------- JAX glue ----------------------------------

def conv2d(x_nhwc, w, stride, pad):
    """Conv via im2col (glue) + bias-less Pallas matmul. x: (B,H,W,Cin) bf16,
    w: (kh,kw,Cin,Cout)."""
    B, H, W, Cin = x_nhwc.shape
    kh, kw, _, Cout = w.shape
    x_nhwc = x_nhwc.astype(jnp.bfloat16)
    xp = jnp.pad(x_nhwc, ((0, 0), (pad, pad), (pad, pad), (0, 0))) if pad else x_nhwc
    Ho = (H + 2 * pad - kh) // stride + 1
    Wo = (W + 2 * pad - kw) // stride + 1
    if kh == 1 and kw == 1:
        # 1x1 conv: no im2col expansion, just (strided) reshape.
        patches = xp[:, ::stride, ::stride, :].reshape(B * Ho * Wo, Cin)
    else:
        cols = []
        for i in range(kh):
            for j in range(kw):
                cols.append(jax.lax.slice(
                    xp, (0, i, j, 0),
                    (B, i + (Ho - 1) * stride + 1, j + (Wo - 1) * stride + 1, Cin),
                    (1, stride, stride, 1)))
        patches = jnp.concatenate(cols, axis=-1).reshape(B * Ho * Wo, kh * kw * Cin)
    out = matmul_bias(patches, w.reshape(kh * kw * Cin, Cout))
    return out.reshape(B, Ho, Wo, Cout)


def maxpool3x3_s2(x_nhwc):
    # TODO(synk): 3x3/s2 maxpool kept in plain JAX (9-way strided-slice max glue).
    B, H, W, C = x_nhwc.shape
    xp = jnp.pad(x_nhwc, ((0, 0), (1, 1), (1, 1), (0, 0)),
                 constant_values=-jnp.inf)
    Ho = (H + 2 - 3) // 2 + 1
    Wo = (W + 2 - 3) // 2 + 1
    vals = []
    for i in range(3):
        for j in range(3):
            vals.append(jax.lax.slice(
                xp, (0, i, j, 0),
                (B, i + (Ho - 1) * 2 + 1, j + (Wo - 1) * 2 + 1, C),
                (1, 2, 2, 1)))
    return jnp.max(jnp.stack(vals, axis=0), axis=0)


def bn_act_nhwc(x_nhwc, bn, relu):
    B, H, W, C = x_nhwc.shape
    y = batchnorm_act(x_nhwc.reshape(B * H * W, C), bn[0], bn[1], relu=relu)
    return y.reshape(B, H, W, C)


def bottleneck(x, blk):
    s = blk["stride"]
    out = conv2d(x, blk["w1"], 1, 0)
    out = bn_act_nhwc(out, blk["bn1"], relu=True)
    out = conv2d(out, blk["w2"], s, 1)
    out = bn_act_nhwc(out, blk["bn2"], relu=True)
    out = conv2d(out, blk["w3"], 1, 0)
    if "wd" in blk:
        idn = conv2d(x, blk["wd"], s, 0)
        idn = bn_act_nhwc(idn, blk["bnd"], relu=False)
    else:
        idn = x
    # bn3 + residual add + ReLU fused in one row-tiled kernel.
    B, H, W, C = out.shape
    y = batchnorm_act(out.reshape(B * H * W, C), blk["bn3"][0], blk["bn3"][1],
                      relu=True, residual=idn.reshape(B * H * W, C))
    return y.reshape(B, H, W, C)


def backbone_forward(params, x_nchw):
    x = jnp.transpose(x_nchw, (0, 2, 3, 1)).astype(jnp.bfloat16)  # NCHW -> NHWC bf16
    # ResNet-50 stem
    x = conv2d(x, params["stem_w"], stride=2, pad=3)
    x = bn_act_nhwc(x, params["stem_bn"], relu=True)
    x = maxpool3x3_s2(x)
    # ResNet-50 stages
    for layer in params["layers"]:
        for blk in layer:
            x = bottleneck(x, blk)
    feat = jnp.mean(x.astype(jnp.float32), axis=(1, 2))           # global avg pool -> (B, 2048)
    # ProjectionHead: Linear -> BN1d -> ReLU -> Linear
    w1, b1 = params["fc1"]
    z = matmul_bias(feat, w1, b1)
    z = batchnorm_act(z, params["head_bn"][0], params["head_bn"][1], relu=True)
    w2, b2 = params["fc2"]
    z = matmul_bias(z, w2, b2, out_dtype=jnp.float32)
    return l2_normalize(z)                                        # F.normalize(embedding)


# --------------------------- deterministic init -----------------------------

class _KeyGen:
    def __init__(self, seed):
        self._key = jax.random.PRNGKey(seed)

    def __call__(self):
        self._key, sub = jax.random.split(self._key)
        return sub


def _conv_init(kg, cin, cout, k):
    fan_in = cin * k * k
    return jax.random.normal(kg(), (k, k, cin, cout), jnp.float32) * (2.0 / fan_in) ** 0.5


def _bn_init(c):
    return (jnp.ones((c,), jnp.float32), jnp.zeros((c,), jnp.float32))


def _linear_init(kg, cin, cout):
    bound = 1.0 / (cin ** 0.5)
    w = jax.random.uniform(kg(), (cin, cout), jnp.float32, -bound, bound)
    b = jax.random.uniform(kg(), (cout,), jnp.float32, -bound, bound)
    return w, b


_LAYER_CFG = [(64, 3, 1), (128, 4, 2), (256, 6, 2), (512, 3, 2)]  # resnet50 bottleneck stages


def init_params(seed=0, hidden_dim=4096, dim_out=512):
    kg = _KeyGen(seed)
    p = {"stem_w": _conv_init(kg, 3, 64, 7), "stem_bn": _bn_init(64)}
    layers = []
    in_c = 64
    for width, n_blocks, stride in _LAYER_CFG:
        layer = []
        for bi in range(n_blocks):
            s = stride if bi == 0 else 1
            blk = {
                "stride": s,
                "w1": _conv_init(kg, in_c, width, 1), "bn1": _bn_init(width),
                "w2": _conv_init(kg, width, width, 3), "bn2": _bn_init(width),
                "w3": _conv_init(kg, width, width * 4, 1), "bn3": _bn_init(width * 4),
            }
            if s != 1 or in_c != width * 4:
                blk["wd"] = _conv_init(kg, in_c, width * 4, 1)
                blk["bnd"] = _bn_init(width * 4)
            layer.append(blk)
            in_c = width * 4
        layers.append(layer)
    p["layers"] = layers
    dim_in = in_c                       # 2048 for resnet50
    p["fc1"] = _linear_init(kg, dim_in, hidden_dim)
    p["head_bn"] = _bn_init(hidden_dim)
    p["fc2"] = _linear_init(kg, hidden_dim, dim_out)
    return p


# ---------------------------------- main ------------------------------------

if __name__ == "__main__":
    params = init_params(seed=0, hidden_dim=4096, dim_out=512)
    x = jax.random.normal(jax.random.PRNGKey(0), (2, 3, 16, 16), jnp.float32)  # NCHW
    out = backbone_forward(params, x)
    out = jax.block_until_ready(out)
    assert out.shape == (2, 512), out.shape
    assert bool(jnp.all(jnp.isfinite(out)))
    norms = jnp.linalg.norm(out, axis=-1)
    assert bool(jnp.all(jnp.abs(norms - 1.0) < 1e-3)), norms
    print("KERNEL_OK")
</pallas_src>

<mosaic_0001>
module attributes {stable_mosaic.version = 11 : i64} {
  func.func @_matmul_kernel(%arg0: i32, %arg1: i32, %arg2: i32, %arg3: memref<128x256xbf16, #tpu.memory_space<vmem>>, %arg4: memref<256x128xbf16, #tpu.memory_space<vmem>>, %arg5: memref<128x128xbf16, #tpu.memory_space<vmem>>, %arg6: memref<128x128xf32, #tpu.memory_space<vmem>>) attributes {dimension_semantics = [#tpu.dimension_semantics<parallel>, #tpu.dimension_semantics<parallel>, #tpu.dimension_semantics<arbitrary>], iteration_bounds = array<i64: 1, 1, 1>, scalar_prefetch = 0 : i64, scratch_operands = 1 : i64, tpu.core_type = #tpu.core_type<tc>, window_params = [{transform_indices = @transform_0, window_bounds = array<i64: 128, 256>}, {transform_indices = @transform_1, window_bounds = array<i64: 256, 128>}, {transform_indices = @transform_2, window_bounds = array<i64: 128, 128>}]} {
    %c0_i32 = arith.constant 0 : i32
    %0 = arith.cmpi eq, %arg2, %c0_i32 : i32
    %1 = arith.extui %0 : i1 to i32
    %c0_i32_0 = arith.constant 0 : i32
    %2 = arith.cmpi ne, %1, %c0_i32_0 : i32
    scf.if %2 {
      %cst_10 = arith.constant 0.000000e+00 : f32
      %12 = vector.broadcast %cst_10 : f32 to vector<128x128xf32>
      %c0_11 = arith.constant 0 : index
      %c0_12 = arith.constant 0 : index
      %13 = vector.load %arg6[%c0_11, %c0_12] : memref<128x128xf32, #tpu.memory_space<vmem>>, vector<128x128xf32>
      tpu.vector_store %arg6[%c0_11, %c0_12], %12 {strides = array<i32>} : memref<128x128xf32, #tpu.memory_space<vmem>>, vector<128x128xf32>,
    } else {
    }
    %c0 = arith.constant 0 : index
    %c0_1 = arith.constant 0 : index
    %3 = vector.load %arg6[%c0, %c0_1] : memref<128x128xf32, #tpu.memory_space<vmem>>, vector<128x128xf32>
    %c0_2 = arith.constant 0 : index
    %c0_3 = arith.constant 0 : index
    %4 = vector.load %arg3[%c0_2, %c0_3] : memref<128x256xbf16, #tpu.memory_space<vmem>>, vector<128x256xbf16>
    %c0_4 = arith.constant 0 : index
    %c0_5 = arith.constant 0 : index
    %5 = vector.load %arg4[%c0_4, %c0_5] : memref<256x128xbf16, #tpu.memory_space<vmem>>, vector<256x128xbf16>
    %cst = arith.constant dense<0.000000e+00> : vector<128x128xf32>
    %6 = tpu.matmul %4, %5, %cst {dimension_numbers = #tpu.dot_dimension_numbers<[1], [0], [0], [1], [0, 0, 1, 1], [], []>} : vector<128x256xbf16>, vector<256x128xbf16>, vector<128x128xf32> -> vector<128x128xf32>
    %7 = arith.addf %3, %6 : vector<128x128xf32>
    %c0_6 = arith.constant 0 : index
    %c0_7 = arith.constant 0 : index
    %8 = vector.load %arg6[%c0_6, %c0_7] : memref<128x128xf32, #tpu.memory_space<vmem>>, vector<128x128xf32>
    tpu.vector_store %arg6[%c0_6, %c0_7], %7 {strides = array<i32>} : memref<128x128xf32, #tpu.memory_space<vmem>>, vector<128x128xf32>,
    %c0_i32_8 = arith.constant 0 : i32
    %9 = arith.cmpi eq, %arg2, %c0_i32_8 : i32
    %10 = arith.extui %9 : i1 to i32
    %c0_i32_9 = arith.constant 0 : i32
    %11 = arith.cmpi ne, %10, %c0_i32_9 : i32
    scf.if %11 {
      %c0_10 = arith.constant 0 : index
      %c0_11 = arith.constant 0 : index
      %12 = vector.load %arg6[%c0_10, %c0_11] : memref<128x128xf32, #tpu.memory_space<vmem>>, vector<128x128xf32>
      %13 = arith.truncf %12 : vector<128x128xf32> to vector<128x128xbf16>
      %c0_12 = arith.constant 0 : index
      %c0_13 = arith.constant 0 : index
      %14 = vector.load %arg5[%c0_12, %c0_13] : memref<128x128xbf16, #tpu.memory_space<vmem>>, vector<128x128xbf16>
      tpu.vector_store %arg5[%c0_12, %c0_13], %13 {strides = array<i32>} : memref<128x128xbf16, #tpu.memory_space<vmem>>, vector<128x128xbf16>,
    } else {
    }
    return
  }
  func.func @transform_0(%arg0: i32, %arg1: i32, %arg2: i32) -> (i32, i32) {
    %c0_i32 = arith.constant 0 : i32
    return %arg0, %arg2 : i32, i32
  }
  func.func @transform_1(%arg0: i32, %arg1: i32, %arg2: i32) -> (i32, i32) {
    %c0_i32 = arith.constant 0 : i32
    return %arg2, %arg1 : i32, i32
  }
  func.func @transform_2(%arg0: i32, %arg1: i32, %arg2: i32) -> (i32, i32) {
    %c0_i32 = arith.constant 0 : i32
    return %arg0, %arg1 : i32, i32
  }
}

</mosaic_0001>

<llo_original>
// kernel: tpu_custom_call.1
$region0: #{tpu_custom_call.1}
  #allocation0 [shape = 'u32[]', space=smem, size = 0x4, offset = 0x4, fixed_abs, tag = 'smem constant byte address 0x4 - core index']
  #allocation1 [shape = 'u32[72,128]{1,0:T(1,128)}', space=vmem, size = 0x9000, scoped, tag = 'internal scratch']
  #allocation2 [shape = 'f32[128,128]{1,0:T(8,128)}', space=vmem, size = 0x10000, scoped, tag = 'scratch operand']
  %s0 = inlined_call_operand.hbm [shape: bf16[128,256], index: 0, kind: input, shape index: {}]
  %s1 = inlined_call_operand.hbm [shape: bf16[256,128], index: 1, kind: input, shape index: {}]
  %s2 = inlined_call_operand.hbm [shape: bf16[128,128], index: 2, kind: output, shape index: {}]
  %s3 = sld [smem:[#allocation0]]
  $region34: #{tpu_custom_call.1} parent=0
    _
  %s5 = ssub.s32 1, %s3
  %s6 = scalar_select 0, %s5, %s3
  $region1: #{tpu_custom_call.1} parent=0
    #allocation3 [shape = 'u8[65536]{0}', space=vmem, size = 0x10000, scoped, tag = 'input window, operand 0, single buffered']
    #allocation4 [shape = 's32[1]{0}', space=sflag, size = 0x4, scoped, tag = 'scoped memory for tpu_custom_call.1']
    #allocation5 [shape = 's32[1]{0}', space=sflag, size = 0x4, scoped, tag = 'scoped memory for tpu_custom_call.1']
    #allocation6 [shape = 'u8[65536]{0}', space=vmem, size = 0x10000, scoped, tag = 'input window, operand 1, single buffered']
    #allocation7 [shape = 's32[1]{0}', space=sflag, size = 0x4, scoped, tag = 'scoped memory for tpu_custom_call.1']
    #allocation8 [shape = 'u8[32768]{0}', space=vmem, size = 0x8000, scoped, tag = 'output window, operand 0, single buffered']
    %7 = vsyncpa [#allocation4], 0
    %8 = vsyncpa [#allocation7], 0
    %9 = vsyncpa [#allocation5], 0
    // Predicated region
    $region2: #{tpu_custom_call.1} parent=1 // pred_check
      _
    $region3: #{tpu_custom_call.1} parent=1 // pred_check_branch
      %11 = sbr.rel (0) target = $region5
    $region4: #{tpu_custom_call.1} parent=1 // pred_region
      %13 = vsyncadd [#allocation4], 0
      %s14 = sshll.u32 %s0, 4
      %s15 = int_to_ptr.hbm [resolvable:$true] %s14
      %s16 = sshll.u32 [#allocation3], 4
      %s17 = int_to_ptr.vmem [resolvable:$true] %s16
      %22 = dma.hbm_to_vmem [thread:$0]  %s15, 2048, %s17, [#allocation4], 128, 128, 8
    $region5: #{tpu_custom_call.1} parent=1 // pred_fallthru
      _
    // Predicated region
    $region6: #{tpu_custom_call.1} parent=1 // pred_check
      _
    $region7: #{tpu_custom_call.1} parent=1 // pred_check_branch
      %24 = sbr.rel (0) target = $region9
    $region8: #{tpu_custom_call.1} parent=1 // pred_region
      %26 = vsyncadd [#allocation7], 0
      %s27 = sshll.u32 %s1, 4
      %s28 = int_to_ptr.hbm [resolvable:$true] %s27
      %s29 = sshll.u32 [#allocation6], 4
      %s30 = int_to_ptr.vmem [resolvable:$true] %s29
      %35 = dma.hbm_to_vmem [thread:$0]  %s28, 2048, %s30, [#allocation7], 64, 64, 4
    $region9: #{tpu_custom_call.1} parent=1 // pred_fallthru
      _
    // Predicated region
    $region10: #{tpu_custom_call.1} parent=1 // pred_check
      _
    $region11: #{tpu_custom_call.1} parent=1 // pred_check_branch
      %37 = sbr.rel (0) target = $region13
    $region12: #{tpu_custom_call.1} parent=1 // pred_region
      %39 = dma.done [#allocation4], 2048
    $region13: #{tpu_custom_call.1} parent=1 // pred_fallthru
      _
    // Predicated region
    $region14: #{tpu_custom_call.1} parent=1 // pred_check
      _
    $region15: #{tpu_custom_call.1} parent=1 // pred_check_branch
      %41 = sbr.rel (0) target = $region17
    $region16: #{tpu_custom_call.1} parent=1 // pred_region
      %43 = dma.done [#allocation7], 2048
    $region17: #{tpu_custom_call.1} parent=1 // pred_fallthru
      _
    %p44 = scmp.eq.s32.totalorder 0, 0
    // Predicated region
    $region18: #{tpu_custom_call.1} parent=1 // pred_check
      %p45 = pneg %p44
    $region19: #{tpu_custom_call.1} parent=1 // pred_check_branch
      %47 = sbr.rel (%p45) target = $region21
    $region20: #{tpu_custom_call.1} parent=1 // pred_region
      %48 = vst [vmem:[#allocation2] sm:$0xff] 0.0
      %49 = vst [vmem:[#allocation2 + $0x8] sm:$0xff] 0.0
      %50 = vst [vmem:[#allocation2 + $0x10] sm:$0xff] 0.0
      %51 = vst [vmem:[#allocation2 + $0x18] sm:$0xff] 0.0
      %52 = vst [vmem:[#allocation2 + $0x20] sm:$0xff] 0.0
      %53 = vst [vmem:[#allocation2 + $0x28] sm:$0xff] 0.0
      %54 = vst [vmem:[#allocation2 + $0x30] sm:$0xff] 0.0
      %55 = vst [vmem:[#allocation2 + $0x38] sm:$0xff] 0.0
      %56 = vst [vmem:[#allocation2 + $0x40] sm:$0xff] 0.0
      %57 = vst [vmem:[#allocation2 + $0x48] sm:$0xff] 0.0
      %58 = vst [vmem:[#allocation2 + $0x50] sm:$0xff] 0.0
      %59 = vst [vmem:[#allocation2 + $0x58] sm:$0xff] 0.0
      %60 = vst [vmem:[#allocation2 + $0x60] sm:$0xff] 0.0
      %61 = vst [vmem:[#allocation2 + $0x68] sm:$0xff] 0.0
      %62 = vst [vmem:[#allocation2 + $0x70] sm:$0xff] 0.0
      %63 = vst [vmem:[#allocation2 + $0x78] sm:$0xff] 0.0
    $region21: #{tpu_custom_call.1} parent=1 // pred_fallthru
      _
    %v64 = vld [vmem:[#allocation2] sm:$0xff]
    %v65 = vld [vmem:[#allocation2 + $0x8] sm:$0xff]
    %v66 = vld [vmem:[#allocation2 + $0x10] sm:$0xff]
    %v67 = vld [vmem:[#allocation2 + $0x18] sm:$0xff]
    %v68 = vld [vmem:[#allocation2 + $0x20] sm:$0xff]
    %v69 = vld [vmem:[#allocation2 + $0x28] sm:$0xff]
    %v70 = vld [vmem:[#allocation2 + $0x30] sm:$0xff]
    %v71 = vld [vmem:[#allocation2 + $0x38] sm:$0xff]
    %v72 = vld [vmem:[#allocation2 + $0x40] sm:$0xff]
    %v73 = vld [vmem:[#allocation2 + $0x48] sm:$0xff]
    %v74 = vld [vmem:[#allocation2 + $0x50] sm:$0xff]
    %v75 = vld [vmem:[#allocation2 + $0x58] sm:$0xff]
    %v76 = vld [vmem:[#allocation2 + $0x60] sm:$0xff]
    %v77 = vld [vmem:[#allocation2 + $0x68] sm:$0xff]
    %v78 = vld [vmem:[#allocation2 + $0x70] sm:$0xff]
    %v79 = vld [vmem:[#allocation2 + $0x78] sm:$0xff]
    %v80 = vld [vmem:[#allocation3] sm:$0xff]
    %v81 = vld [vmem:[#allocation3 + $0x8] sm:$0xff]
    %v82 = vld [vmem:[#allocation3 + $0x10] sm:$0xff]
    %v83 = vld [vmem:[#allocation3 + $0x18] sm:$0xff]
    %v84 = vld [vmem:[#allocation3 + $0x20] sm:$0xff]
    %v85 = vld [vmem:[#allocation3 + $0x28] sm:$0xff]
    %v86 = vld [vmem:[#allocation3 + $0x30] sm:$0xff]
    %v87 = vld [vmem:[#allocation3 + $0x38] sm:$0xff]
    %v88 = vld [vmem:[#allocation3 + $0x40] sm:$0xff]
    %v89 = vld [vmem:[#allocation3 + $0x48] sm:$0xff]
    %v90 = vld [vmem:[#allocation3 + $0x50] sm:$0xff]
    %v91 = vld [vmem:[#allocation3 + $0x58] sm:$0xff]
    %v92 = vld [vmem:[#allocation3 + $0x60] sm:$0xff]
    %v93 = vld [vmem:[#allocation3 + $0x68] sm:$0xff]
    %v94 = vld [vmem:[#allocation3 + $0x70] sm:$0xff]
    %v95 = vld [vmem:[#allocation3 + $0x78] sm:$0xff]
    %v96 = vld [vmem:[#allocation6] sm:$0xf]
    %v97 = vld [vmem:[#allocation6 + $0x4] sm:$0xf]
    %v98 = vld [vmem:[#allocation6 + $0x8] sm:$0xf]
    %v99 = vld [vmem:[#allocation6 + $0xc] sm:$0xf]
    %v100 = vld [vmem:[#allocation6 + $0x10] sm:$0xf]
    %v101 = vld [vmem:[#allocation6 + $0x14] sm:$0xf]
    %v102 = vld [vmem:[#allocation6 + $0x18] sm:$0xf]
    %v103 = vld [vmem:[#allocation6 + $0x1c] sm:$0xf]
    %v104 = vld [vmem:[#allocation6 + $0x20] sm:$0xf]
    %v105 = vld [vmem:[#allocation6 + $0x24] sm:$0xf]
    %v106 = vld [vmem:[#allocation6 + $0x28] sm:$0xf]
    %v107 = vld [vmem:[#allocation6 + $0x2c] sm:$0xf]
    %v108 = vld [vmem:[#allocation6 + $0x30] sm:$0xf]
    %v109 = vld [vmem:[#allocation6 + $0x34] sm:$0xf]
    %v110 = vld [vmem:[#allocation6 + $0x38] sm:$0xf]
    %v111 = vld [vmem:[#allocation6 + $0x3c] sm:$0xf]
    %v112 = vld [vmem:[#allocation6 + $0x40] sm:$0xf]
    %v113 = vld [vmem:[#allocation6 + $0x44] sm:$0xf]
    %v114 = vld [vmem:[#allocation6 + $0x48] sm:$0xf]
    %v115 = vld [vmem:[#allocation6 + $0x4c] sm:$0xf]
    %v116 = vld [vmem:[#allocation6 + $0x50] sm:$0xf]
    %v117 = vld [vmem:[#allocation6 + $0x54] sm:$0xf]
    %v118 = vld [vmem:[#allocation6 + $0x58] sm:$0xf]
    %v119 = vld [vmem:[#allocation6 + $0x5c] sm:$0xf]
    %v120 = vld [vmem:[#allocation6 + $0x60] sm:$0xf]
    %v121 = vld [vmem:[#allocation6 + $0x64] sm:$0xf]
    %v122 = vld [vmem:[#allocation6 + $0x68] sm:$0xf]
    %v123 = vld [vmem:[#allocation6 + $0x6c] sm:$0xf]
    %v124 = vld [vmem:[#allocation6 + $0x70] sm:$0xf]
    %v125 = vld [vmem:[#allocation6 + $0x74] sm:$0xf]
    %v126 = vld [vmem:[#allocation6 + $0x78] sm:$0xf]
    %v127 = vld [vmem:[#allocation6 + $0x7c] sm:$0xf]
    %v144 = vunpack.c.l.b16 %v80
    %v145 = vunpack.c.h.b16 %v80
    %v146 = vunpack.c.l.b16 %v81
    %v147 = vunpack.c.h.b16 %v81
    %v148 = vunpack.c.l.b16 %v82
    %v149 = vunpack.c.h.b16 %v82
    %v150 = vunpack.c.l.b16 %v83
    %v151 = vunpack.c.h.b16 %v83
    %v152 = vunpack.c.l.b16 %v84
    %v153 = vunpack.c.h.b16 %v84
    %v154 = vunpack.c.l.b16 %v85
    %v155 = vunpack.c.h.b16 %v85
    %v156 = vunpack.c.l.b16 %v86
    %v157 = vunpack.c.h.b16 %v86
    %v158 = vunpack.c.l.b16 %v87
    %v159 = vunpack.c.h.b16 %v87
    %v160 = vunpack.c.l.b16 %v88
    %v161 = vunpack.c.h.b16 %v88
    %v162 = vunpack.c.l.b16 %v89
    %v163 = vunpack.c.h.b16 %v89
    %v164 = vunpack.c.l.b16 %v90
    %v165 = vunpack.c.h.b16 %v90
    %v166 = vunpack.c.l.b16 %v91
    %v167 = vunpack.c.h.b16 %v91
    %v168 = vunpack.c.l.b16 %v92
    %v169 = vunpack.c.h.b16 %v92
    %v170 = vunpack.c.l.b16 %v93
    %v171 = vunpack.c.h.b16 %v93
    %v172 = vunpack.c.l.b16 %v94
    %v173 = vunpack.c.h.b16 %v94
    %v174 = vunpack.c.l.b16 %v95
    %v175 = vunpack.c.h.b16 %v95
    %v176 = vpack.c.b16 %v146, %v144
    %v177 = vpack.c.b16 %v147, %v145
    %v178 = vpack.c.b16 %v150, %v148
    %v179 = vpack.c.b16 %v151, %v149
    %v180 = vpack.c.b16 %v154, %v152
    %v181 = vpack.c.b16 %v155, %v153
    %v182 = vpack.c.b16 %v158, %v156
    %v183 = vpack.c.b16 %v159, %v157
    %v184 = vpack.c.b16 %v162, %v160
    %v185 = vpack.c.b16 %v163, %v161
    %v186 = vpack.c.b16 %v166, %v164
    %v187 = vpack.c.b16 %v167, %v165
    %v188 = vpack.c.b16 %v170, %v168
    %v189 = vpack.c.b16 %v171, %v169
    %v190 = vpack.c.b16 %v174, %v172
    %v191 = vpack.c.b16 %v175, %v173
    %v240 = vunpack.c.l.b16 %v96
    %v241 = vunpack.c.l.b16 %v97
    %v242 = vunpack.c.l.b16 %v98
    %v243 = vunpack.c.l.b16 %v99
    %v244 = vunpack.c.l.b16 %v100
    %v245 = vunpack.c.l.b16 %v101
    %v246 = vunpack.c.l.b16 %v102
    %v247 = vunpack.c.l.b16 %v103
    %v248 = vunpack.c.l.b16 %v104
    %v249 = vunpack.c.l.b16 %v105
    %v250 = vunpack.c.l.b16 %v106
    %v251 = vunpack.c.l.b16 %v107
    %v252 = vunpack.c.l.b16 %v108
    %v253 = vunpack.c.l.b16 %v109
    %v254 = vunpack.c.l.b16 %v110
    %v255 = vunpack.c.l.b16 %v111
    %v256 = vunpack.c.l.b16 %v112
    %v257 = vunpack.c.l.b16 %v113
    %v258 = vunpack.c.l.b16 %v114
    %v259 = vunpack.c.l.b16 %v115
    %v260 = vunpack.c.l.b16 %v116
    %v261 = vunpack.c.l.b16 %v117
    %v262 = vunpack.c.l.b16 %v118
    %v263 = vunpack.c.l.b16 %v119
    %v264 = vunpack.c.l.b16 %v120
    %v265 = vunpack.c.l.b16 %v121
    %v266 = vunpack.c.l.b16 %v122
    %v267 = vunpack.c.l.b16 %v123
    %v268 = vunpack.c.l.b16 %v124
    %v269 = vunpack.c.l.b16 %v125
    %v270 = vunpack.c.l.b16 %v126
    %v271 = vunpack.c.l.b16 %v127
    %v272 = vpack.c.b16 %v241, %v240
    %v273 = vpack.c.b16 %v243, %v242
    %v274 = vpack.c.b16 %v245, %v244
    %v275 = vpack.c.b16 %v247, %v246
    %v276 = vpack.c.b16 %v249, %v248
    %v277 = vpack.c.b16 %v251, %v250
    %v278 = vpack.c.b16 %v253, %v252
    %v279 = vpack.c.b16 %v255, %v254
    %v280 = vpack.c.b16 %v257, %v256
    %v281 = vpack.c.b16 %v259, %v258
    %v282 = vpack.c.b16 %v261, %v260
    %v283 = vpack.c.b16 %v263, %v262
    %v284 = vpack.c.b16 %v265, %v264
    %v285 = vpack.c.b16 %v267, %v266
    %v286 = vpack.c.b16 %v269, %v268
    %v287 = vpack.c.b16 %v271, %v270
    %304 = vmatpush.bf16.msra.mxu0 %v279
    %305 = vmatpush.bf16.msra.mxu0 %v278
    %306 = vmatpush.bf16.msra.mxu0 %v277
    %307 = vmatpush.bf16.msra.mxu0 %v276
    %308 = vmatpush.bf16.msra.mxu0 %v275
    %309 = vmatpush.bf16.msra.mxu0 %v274
    %310 = vmatpush.bf16.msra.mxu0 %v273
    %311 = vmatpush.bf16.msra.mxu0 %v272
    %312 = vmatmul.bf16.gmra.mxu0 %v176
    %v313 = vpop.f32.mrf.mxu0
    %v314 = vadd.f32 0.0, %v313
    %v315 = vpop.f32.mrf.mxu0
    %v316 = vadd.f32 0.0, %v315
    %317 = vmatmul.bf16.gmra.mxu0 %v178
    %v318 = vpop.f32.mrf.mxu0
    %v319 = vadd.f32 0.0, %v318
    %v320 = vpop.f32.mrf.mxu0
    %v321 = vadd.f32 0.0, %v320
    %322 = vmatmul.bf16.gmra.mxu0 %v180
    %v323 = vpop.f32.mrf.mxu0
    %v324 = vadd.f32 0.0, %v323
    %v325 = vpop.f32.mrf.mxu0
    %v326 = vadd.f32 0.0, %v325
    %327 = vmatmul.bf16.gmra.mxu0 %v182
    %v328 = vpop.f32.mrf.mxu0
    %v329 = vadd.f32 0.0, %v328
    %v330 = vpop.f32.mrf.mxu0
    %v331 = vadd.f32 0.0, %v330
    %332 = vmatmul.bf16.gmra.mxu0 %v184
    %v333 = vpop.f32.mrf.mxu0
    %v334 = vadd.f32 0.0, %v333
    %v335 = vpop.f32.mrf.mxu0
    %v336 = vadd.f32 0.0, %v335
    %337 = vmatmul.bf16.gmra.mxu0 %v186
    %v338 = vpop.f32.mrf.mxu0
    %v339 = vadd.f32 0.0, %v338
    %v340 = vpop.f32.mrf.mxu0
    %v341 = vadd.f32 0.0, %v340
    %342 = vmatmul.bf16.gmra.mxu0 %v188
    %v343 = vpop.f32.mrf.mxu0
    %v344 = vadd.f32 0.0, %v343
    %v345 = vpop.f32.mrf.mxu0
    %v346 = vadd.f32 0.0, %v345
    %347 = vmatmul.bf16.gmra.mxu0 %v190
    %v348 = vpop.f32.mrf.mxu0
    %v349 = vadd.f32 0.0, %v348
    %v350 = vpop.f32.mrf.mxu0
    %v351 = vadd.f32 0.0, %v350
    %352 = vdwg.mxu0
    %353 = vmatpush.bf16.msra.mxu0 %v287
    %354 = vmatpush.bf16.msra.mxu0 %v286
    %355 = vmatpush.bf16.msra.mxu0 %v285
    %356 = vmatpush.bf16.msra.mxu0 %v284
    %357 = vmatpush.bf16.msra.mxu0 %v283
    %358 = vmatpush.bf16.msra.mxu0 %v282
    %359 = vmatpush.bf16.msra.mxu0 %v281
    %360 = vmatpush.bf16.msra.mxu0 %v280
    %361 = vmatmul.bf16.gmra.mxu0 %v177
    %v362 = vpop.f32.mrf.mxu0
    %v363 = vadd.f32 %v314, %v362
    %v364 = vpop.f32.mrf.mxu0
    %v365 = vadd.f32 %v316, %v364
    %366 = vmatmul.bf16.gmra.mxu0 %v179
    %v367 = vpop.f32.mrf.mxu0
    %v368 = vadd.f32 %v319, %v367
    %v369 = vpop.f32.mrf.mxu0
    %v370 = vadd.f32 %v321, %v369
    %371 = vmatmul.bf16.gmra.mxu0 %v181
    %v372 = vpop.f32.mrf.mxu0
    %v373 = vadd.f32 %v324, %v372
    %v374 = vpop.f32.mrf.mxu0
    %v375 = vadd.f32 %v326, %v374
    %376 = vmatmul.bf16.gmra.mxu0 %v183
    %v377 = vpop.f32.mrf.mxu0
    %v378 = vadd.f32 %v329, %v377
    %v379 = vpop.f32.mrf.mxu0
    %v380 = vadd.f32 %v331, %v379
    %381 = vmatmul.bf16.gmra.mxu0 %v185
    %v382 = vpop.f32.mrf.mxu0
    %v383 = vadd.f32 %v334, %v382
    %v384 = vpop.f32.mrf.mxu0
    %v385 = vadd.f32 %v336, %v384
    %386 = vmatmul.bf16.gmra.mxu0 %v187
    %v387 = vpop.f32.mrf.mxu0
    %v388 = vadd.f32 %v339, %v387
    %v389 = vpop.f32.mrf.mxu0
    %v390 = vadd.f32 %v341, %v389
    %391 = vmatmul.bf16.gmra.mxu0 %v189
    %v392 = vpop.f32.mrf.mxu0
    %v393 = vadd.f32 %v344, %v392
    %v394 = vpop.f32.mrf.mxu0
    %v395 = vadd.f32 %v346, %v394
    %396 = vmatmul.bf16.gmra.mxu0 %v191
    %v397 = vpop.f32.mrf.mxu0
    %v398 = vadd.f32 %v349, %v397
    %v399 = vpop.f32.mrf.mxu0
    %v400 = vadd.f32 %v351, %v399
    %401 = vdwg.mxu0
    %v402 = vadd.f32 %v64, %v363
    %v403 = vadd.f32 %v65, %v365
    %v404 = vadd.f32 %v66, %v368
    %v405 = vadd.f32 %v67, %v370
    %v406 = vadd.f32 %v68, %v373
    %v407 = vadd.f32 %v69, %v375
    %v408 = vadd.f32 %v70, %v378
    %v409 = vadd.f32 %v71, %v380
    %v410 = vadd.f32 %v72, %v383
    %v411 = vadd.f32 %v73, %v385
    %v412 = vadd.f32 %v74, %v388
    %v413 = vadd.f32 %v75, %v390
    %v414 = vadd.f32 %v76, %v393
    %v415 = vadd.f32 %v77, %v395
    %v416 = vadd.f32 %v78, %v398
    %v417 = vadd.f32 %v79, %v400
    %418 = vst [vmem:[#allocation2] sm:$0xff] %v402
    %419 = vst [vmem:[#allocation2 + $0x8] sm:$0xff] %v403
    %420 = vst [vmem:[#allocation2 + $0x10] sm:$0xff] %v404
    %421 = vst [vmem:[#allocation2 + $0x18] sm:$0xff] %v405
    %422 = vst [vmem:[#allocation2 + $0x20] sm:$0xff] %v406
    %423 = vst [vmem:[#allocation2 + $0x28] sm:$0xff] %v407
    %424 = vst [vmem:[#allocation2 + $0x30] sm:$0xff] %v408
    %425 = vst [vmem:[#allocation2 + $0x38] sm:$0xff] %v409
    %426 = vst [vmem:[#allocation2 + $0x40] sm:$0xff] %v410
    %427 = vst [vmem:[#allocation2 + $0x48] sm:$0xff] %v411
    %428 = vst [vmem:[#allocation2 + $0x50] sm:$0xff] %v412
    %429 = vst [vmem:[#allocation2 + $0x58] sm:$0xff] %v413
    %430 = vst [vmem:[#allocation2 + $0x60] sm:$0xff] %v414
    %431 = vst [vmem:[#allocation2 + $0x68] sm:$0xff] %v415
    %432 = vst [vmem:[#allocation2 + $0x70] sm:$0xff] %v416
    %433 = vst [vmem:[#allocation2 + $0x78] sm:$0xff] %v417
    // Predicated region
    $region22: #{tpu_custom_call.1} parent=1 // pred_check
      %p434 = pneg %p44
    $region23: #{tpu_custom_call.1} parent=1 // pred_check_branch
      %436 = sbr.rel (%p434) target = $region25
    $region24: #{tpu_custom_call.1} parent=1 // pred_region
      %v437 = vld [vmem:[#allocation2] sm:$0xff]
      %v438 = vld [vmem:[#allocation2 + $0x8] sm:$0xff]
      %v439 = vld [vmem:[#allocation2 + $0x10] sm:$0xff]
      %v440 = vld [vmem:[#allocation2 + $0x18] sm:$0xff]
      %v441 = vld [vmem:[#allocation2 + $0x20] sm:$0xff]
      %v442 = vld [vmem:[#allocation2 + $0x28] sm:$0xff]
      %v443 = vld [vmem:[#allocation2 + $0x30] sm:$0xff]
      %v444 = vld [vmem:[#allocation2 + $0x38] sm:$0xff]
      %v445 = vld [vmem:[#allocation2 + $0x40] sm:$0xff]
      %v446 = vld [vmem:[#allocation2 + $0x48] sm:$0xff]
      %v447 = vld [vmem:[#allocation2 + $0x50] sm:$0xff]
      %v448 = vld [vmem:[#allocation2 + $0x58] sm:$0xff]
      %v449 = vld [vmem:[#allocation2 + $0x60] sm:$0xff]
      %v450 = vld [vmem:[#allocation2 + $0x68] sm:$0xff]
      %v451 = vld [vmem:[#allocation2 + $0x70] sm:$0xff]
      %v452 = vld [vmem:[#allocation2 + $0x78] sm:$0xff]
      %v453 = vpack.c.bf16 %v437, %v437
      %v454 = vpack.c.bf16 %v438, %v438
      %v455 = vpack.c.bf16 %v439, %v439
      %v456 = vpack.c.bf16 %v440, %v440
      %v457 = vpack.c.bf16 %v441, %v441
      %v458 = vpack.c.bf16 %v442, %v442
      %v459 = vpack.c.bf16 %v443, %v443
      %v460 = vpack.c.bf16 %v444, %v444
      %v461 = vpack.c.bf16 %v445, %v445
      %v462 = vpack.c.bf16 %v446, %v446
      %v463 = vpack.c.bf16 %v447, %v447
      %v464 = vpack.c.bf16 %v448, %v448
      %v465 = vpack.c.bf16 %v449, %v449
      %v466 = vpack.c.bf16 %v450, %v450
      %v467 = vpack.c.bf16 %v451, %v451
      %v468 = vpack.c.bf16 %v452, %v452
      %469 = vst [vmem:[#allocation8] sm:$0xf] %v453
      %470 = vst [vmem:[#allocation8 + $0x4] sm:$0xf] %v454
      %471 = vst [vmem:[#allocation8 + $0x8] sm:$0xf] %v455
      %472 = vst [vmem:[#allocation8 + $0xc] sm:$0xf] %v456
      %473 = vst [vmem:[#allocation8 + $0x10] sm:$0xf] %v457
      %474 = vst [vmem:[#allocation8 + $0x14] sm:$0xf] %v458
      %475 = vst [vmem:[#allocation8 + $0x18] sm:$0xf] %v459
      %476 = vst [vmem:[#allocation8 + $0x1c] sm:$0xf] %v460
      %477 = vst [vmem:[#allocation8 + $0x20] sm:$0xf] %v461
      %478 = vst [vmem:[#allocation8 + $0x24] sm:$0xf] %v462
      %479 = vst [vmem:[#allocation8 + $0x28] sm:$0xf] %v463
      %480 = vst [vmem:[#allocation8 + $0x2c] sm:$0xf] %v464
      %481 = vst [vmem:[#allocation8 + $0x30] sm:$0xf] %v465
      %482 = vst [vmem:[#allocation8 + $0x34] sm:$0xf] %v466
      %483 = vst [vmem:[#allocation8 + $0x38] sm:$0xf] %v467
      %484 = vst [vmem:[#allocation8 + $0x3c] sm:$0xf] %v468
    $region25: #{tpu_custom_call.1} parent=1 // pred_fallthru
      _
    // Predicated region
    $region26: #{tpu_custom_call.1} parent=1 // pred_check
      _
    $region27: #{tpu_custom_call.1} parent=1 // pred_check_branch
      %486 = sbr.rel (0) target = $region29
    $region28: #{tpu_custom_call.1} parent=1 // pred_region
      %488 = vsyncadd [#allocation5], 0
      %s489 = sshll.u32 [#allocation8], 4
      %s490 = int_to_ptr.vmem [resolvable:$true] %s489
      %s491 = sshll.u32 %s2, 4
      %s492 = int_to_ptr.hbm [resolvable:$true] %s491
      %497 = dma.vmem_to_hbm [thread:$0]  %s490, 1024, %s492, [#allocation5], 64, 64, 4
    $region29: #{tpu_custom_call.1} parent=1 // pred_fallthru
      _
    // Predicated region
    $region30: #{tpu_custom_call.1} parent=1 // pred_check
      _
    $region31: #{tpu_custom_call.1} parent=1 // pred_check_branch
      %499 = sbr.rel (0) target = $region33
    $region32: #{tpu_custom_call.1} parent=1 // pred_region
      %501 = dma.done [#allocation5], 1024
    $region33: #{tpu_custom_call.1} parent=1 // pred_fallthru
      _
    %502 = vsyncpa [#allocation4], 1
    %503 = vsyncpa [#allocation7], 1
    %504 = vsyncpa [#allocation5], 1

</llo_original>
